<compile_context>
chip_gen: v5e
topology: v5e:2x2
jax: 0.10.0
libtpu: 0.0.40
codegen_flags: <defaults>
</compile_context>

<pallas_src>
import functools

import jax
import jax.numpy as jnp
from jax.experimental import pallas as pl
from jax.experimental.pallas import tpu as pltpu

LANE = 128     # lane (last-dim) tile width
SUBLANE = 8    # sublane (second-to-last dim) tile width for f32


def _round_up(x, m):
    return ((x + m - 1) // m) * m


def _decoder_kernel(x_ref, w1_ref, b1_ref, w2_ref, b2_ref, o_ref, *, compute_dtype):
    """Fused hot path: two MXU matmuls (f32 accumulation) + bias adds + ReLUs."""
    x = x_ref[...].astype(compute_dtype)                        # [bm, D_in] (no-op for f32)
    h = jnp.dot(x, w1_ref[...], preferred_element_type=jnp.float32)   # [bm, H_p] f32
    h = jnp.maximum(h + b1_ref[...], 0.0)                       # f32 bias, bcast over rows
    y = jnp.dot(h.astype(compute_dtype), w2_ref[...],
                preferred_element_type=jnp.float32)              # [bm, D_out] f32
    o_ref[...] = jnp.maximum(y + b2_ref[...], 0.0).astype(o_ref.dtype)


@functools.lru_cache(maxsize=None)
def _single_buffer_weights_ok():
    """One-off, compile-only probe: does pipeline_mode=pl.Buffered(1) lower?

    Keeping the probe separate from the real call means only a lowering
    rejection selects the double-buffered fallback; runtime errors of the
    actual kernel are never swallowed."""
    if not hasattr(pl, "Buffered"):
        return False

    def k(a_ref, o_ref):
        o_ref[...] = a_ref[...] * 2.0

    try:
        probe = pl.pallas_call(
            k,
            out_shape=jax.ShapeDtypeStruct((16, 128), jnp.float32),
            grid_spec=pltpu.PrefetchScalarGridSpec(
                num_scalar_prefetch=0,
                grid=(2,),
                in_specs=[pl.BlockSpec((8, 128), lambda i: (0, 0),
                                       pipeline_mode=pl.Buffered(1))],
                out_specs=pl.BlockSpec((8, 128), lambda i: (i, 0)),
            ),
        )
        jax.jit(probe).lower(jax.ShapeDtypeStruct((8, 128), jnp.float32)).compile()
        return True
    except Exception:
        return False


def _tpu_vmem_bytes():
    try:
        cap = getattr(pltpu.get_tpu_info(), "vmem_capacity_bytes", None)
        if cap:
            return int(cap)
    except Exception:
        pass
    return 64 << 20   # conservative (v7x-sized) default if the query is unavailable


def prepare_decoder_params(w1, b1, w2, b2, *, compute_dtype=jnp.float32):
    """Pad the hidden dim to the 128-lane width and cast weights to the MXU
    input dtype ONCE, outside the per-forward hot path.

    Zero padding is exact: padded hidden columns see 0-weights and 0-bias, so
    relu(0) = 0, and the matching zero rows of w2 contribute nothing.
    w1: [D_in, H], w2: [H, D_out] (transposed vs. torch.nn.Linear storage).
    """
    D_in, H = w1.shape
    D_out = w2.shape[1]
    H_p = _round_up(H, LANE)
    w1p = jnp.zeros((D_in, H_p), compute_dtype).at[:, :H].set(w1.astype(compute_dtype))
    b1p = jnp.zeros((1, H_p), jnp.float32).at[:, :H].set(
        jnp.reshape(b1, (1, H)).astype(jnp.float32))
    w2p = jnp.zeros((H_p, D_out), compute_dtype).at[:H, :].set(w2.astype(compute_dtype))
    b2p = jnp.reshape(b2, (1, D_out)).astype(jnp.float32)
    return w1p, b1p, w2p, b2p


def decoder_forward(x, w1p, b1p, w2p, b2p, *, hidden_dim=None, block_m=None,
                    compute_dtype=None):
    """relu(relu(x @ w1 + b1) @ w2 + b2) using params from prepare_decoder_params."""
    B, D_in = x.shape
    H_p = w1p.shape[1]
    D_out = w2p.shape[1]
    H_real = int(hidden_dim) if hidden_dim is not None else H_p
    if compute_dtype is None:
        compute_dtype = w1p.dtype

    x_bytes = jnp.dtype(x.dtype).itemsize
    w_bytes = jnp.dtype(w1p.dtype).itemsize
    weight_vmem = (D_in * H_p + H_p * D_out) * w_bytes + (H_p + D_out) * 4

    # Single-buffer the constant-index weight specs only when double-buffering
    # them would cost meaningful VMEM (probe is compile-only and cached).
    single_buffer = weight_vmem > (2 << 20) and _single_buffer_weights_ok()
    weight_copies = 1 if single_buffer else 2

    def vmem_estimate(bm):
        io = 2 * bm * D_in * x_bytes + 2 * bm * D_out * x_bytes   # double-buffered x/out
        interm = bm * H_p * 4 + bm * D_out * 4                    # f32 h and y values
        return io + weight_copies * weight_vmem + interm

    # ---- generation-aware VMEM budget / tile caps ---------------------------
    phys_vmem = _tpu_vmem_bytes()
    if phys_vmem >= (100 << 20):          # v5e / v6e: 128 MiB VMEM per core
        vmem_cap = 100 << 20
        max_block_m = 2048
    else:                                 # v7x: 64 MiB per core -> leave headroom
        vmem_cap = 52 << 20
        max_block_m = 1024

    # ---- choose block_m ------------------------------------------------------
    if block_m is None:
        if B <= SUBLANE:
            block_m = B                   # single full-extent batch block
        else:
            # >= 4 grid steps: 2 steps per TensorCore on v7x megacore, so the
            # x/out DMA of step i+1 hides behind the matmuls of step i.
            block_m = min(max(_round_up(pl.cdiv(B, 4), SUBLANE), SUBLANE), max_block_m)
            while block_m > SUBLANE and vmem_estimate(block_m) > vmem_cap:
                block_m = max(SUBLANE, _round_up(block_m // 2, SUBLANE))
    else:
        block_m = min(int(block_m), B)
        if block_m != B:
            block_m = max(SUBLANE, _round_up(block_m, SUBLANE))

    grid = pl.cdiv(B, block_m)

    cost = pl.CostEstimate(
        flops=2 * B * (D_in * H_real + H_real * D_out),   # real (unpadded) dims
        transcendentals=0,
        bytes_accessed=int(B * D_in * x_bytes + weight_vmem + B * D_out * x_bytes),
    )

    # Always set scoped VMEM explicitly (v5e's default is only 16 MiB).
    vmem_limit = int(min(vmem_cap, max(vmem_estimate(block_m) * 5 // 4, 32 << 20)))

    kernel = functools.partial(_decoder_kernel, compute_dtype=compute_dtype)

    def const_spec(shape):
        idx = lambda i: (0,) * len(shape)
        if single_buffer:
            # Constant index_map -> no double buffering needed; halves weight VMEM.
            return pl.BlockSpec(shape, idx, pipeline_mode=pl.Buffered(1))
        return pl.BlockSpec(shape, idx)

    return pl.pallas_call(
        kernel,
        out_shape=jax.ShapeDtypeStruct((B, D_out), x.dtype),
        grid_spec=pltpu.PrefetchScalarGridSpec(
            num_scalar_prefetch=0,
            grid=(grid,),
            in_specs=[
                pl.BlockSpec((block_m, D_in), lambda i: (i, 0)),   # x tile (unpadded)
                const_spec((D_in, H_p)),                           # W1
                const_spec((1, H_p)),                              # b1 (f32)
                const_spec((H_p, D_out)),                          # W2
                const_spec((1, D_out)),                            # b2 (f32)
            ],
            out_specs=pl.BlockSpec((block_m, D_out), lambda i: (i, 0)),
        ),
        compiler_params=pltpu.CompilerParams(
            dimension_semantics=("parallel",),
            vmem_limit_bytes=vmem_limit,
        ),
        cost_estimate=cost,
    )(x, w1p, b1p, w2p, b2p)


def init_decoder_params(key, D_in, H, D_out, dtype=jnp.float32):
    """torch.nn.Linear-style init: U(-1/sqrt(fan_in), 1/sqrt(fan_in)).
    Weights stored transposed vs. PyTorch: W1 [D_in, H], W2 [H, D_out]."""
    k1, k2, k3, k4 = jax.random.split(key, 4)
    bound1 = 1.0 / (D_in ** 0.5)
    bound2 = 1.0 / (H ** 0.5)
    w1 = jax.random.uniform(k1, (D_in, H), dtype, -bound1, bound1)
    b1 = jax.random.uniform(k2, (H,), dtype, -bound1, bound1)
    w2 = jax.random.uniform(k3, (H, D_out), dtype, -bound2, bound2)
    b2 = jax.random.uniform(k4, (D_out,), dtype, -bound2, bound2)
    return w1, b1, w2, b2


def decoder_ref(x, w1, b1, w2, b2):
    h = jnp.maximum(x @ w1 + jnp.reshape(b1, (1, -1)), 0.0)
    return jnp.maximum(h @ w2 + jnp.reshape(b2, (1, -1)), 0.0)


if __name__ == "__main__":
    key = jax.random.PRNGKey(0)
    kx, kp, kx2, kp2 = jax.random.split(key, 4)

    # Case 1: small shapes consistent with Decoder(D_in, H, D_out), single block
    B, D_in, H, D_out = 8, 16, 32, 24
    x = jax.random.normal(kx, (B, D_in), jnp.float32)
    w1, b1, w2, b2 = init_decoder_params(kp, D_in, H, D_out)
    prep = prepare_decoder_params(w1, b1, w2, b2)          # pad/cast weights ONCE
    out = jax.block_until_ready(decoder_forward(x, *prep, hidden_dim=H))
    ref = decoder_ref(x, w1, b1, w2, b2)
    assert out.shape == (B, D_out)
    assert jnp.allclose(out, ref, atol=1e-5, rtol=1e-5), "mismatch vs reference (case 1)"

    # Case 2: batch not a multiple of block_m -> ragged last grid block, grid >= 4
    B2, D_in2, H2, D_out2 = 300, 20, 48, 40
    x2 = jax.random.normal(kx2, (B2, D_in2), jnp.float32)
    w1b, b1b, w2b, b2b = init_decoder_params(kp2, D_in2, H2, D_out2)
    prep2 = prepare_decoder_params(w1b, b1b, w2b, b2b)
    out2 = jax.block_until_ready(decoder_forward(x2, *prep2, hidden_dim=H2))
    ref2 = decoder_ref(x2, w1b, b1b, w2b, b2b)
    assert out2.shape == (B2, D_out2)
    assert jnp.allclose(out2, ref2, atol=1e-5, rtol=1e-5), "mismatch vs reference (case 2)"

    print("KERNEL_OK")
</pallas_src>

<mosaic_0001>
module attributes {stable_mosaic.version = 11 : i64} {
  func.func @_decoder_kernel(%arg0: i32, %arg1: memref<8x16xf32, #tpu.memory_space<vmem>>, %arg2: memref<16x128xf32, #tpu.memory_space<vmem>>, %arg3: memref<1x128xf32, #tpu.memory_space<vmem>>, %arg4: memref<128x24xf32, #tpu.memory_space<vmem>>, %arg5: memref<1x24xf32, #tpu.memory_space<vmem>>, %arg6: memref<8x24xf32, #tpu.memory_space<vmem>>) attributes {dimension_semantics = [#tpu.dimension_semantics<parallel>], iteration_bounds = array<i64: 1>, scalar_prefetch = 0 : i64, scratch_operands = 0 : i64, tpu.core_type = #tpu.core_type<tc>, window_params = [{transform_indices = @transform_0, window_bounds = array<i64: 8, 16>}, {pipeline_mode = #tpu.pipeline_mode<synchronous>, transform_indices = @transform_1, window_bounds = array<i64: 16, 128>}, {pipeline_mode = #tpu.pipeline_mode<synchronous>, transform_indices = @transform_2, window_bounds = array<i64: 1, 128>}, {pipeline_mode = #tpu.pipeline_mode<synchronous>, transform_indices = @transform_3, window_bounds = array<i64: 128, 24>}, {pipeline_mode = #tpu.pipeline_mode<synchronous>, transform_indices = @transform_4, window_bounds = array<i64: 1, 24>}, {transform_indices = @transform_5, window_bounds = array<i64: 8, 24>}]} {
    %c0 = arith.constant 0 : index
    %c0_0 = arith.constant 0 : index
    %0 = vector.load %arg1[%c0, %c0_0] : memref<8x16xf32, #tpu.memory_space<vmem>>, vector<8x16xf32>
    %c0_1 = arith.constant 0 : index
    %c0_2 = arith.constant 0 : index
    %1 = vector.load %arg2[%c0_1, %c0_2] : memref<16x128xf32, #tpu.memory_space<vmem>>, vector<16x128xf32>
    %cst = arith.constant dense<0.000000e+00> : vector<8x128xf32>
    %2 = tpu.matmul %0, %1, %cst {dimension_numbers = #tpu.dot_dimension_numbers<[1], [0], [0], [1], [0, 0, 1, 1], [], []>} : vector<8x16xf32>, vector<16x128xf32>, vector<8x128xf32> -> vector<8x128xf32>
    %c0_3 = arith.constant 0 : index
    %c0_4 = arith.constant 0 : index
    %3 = vector.load %arg3[%c0_3, %c0_4] : memref<1x128xf32, #tpu.memory_space<vmem>>, vector<1x128xf32>
    %4 = vector.broadcast %3 : vector<1x128xf32> to vector<8x128xf32>
    %5 = arith.addf %2, %4 : vector<8x128xf32>
    %cst_5 = arith.constant 0.000000e+00 : f32
    %6 = vector.broadcast %cst_5 : f32 to vector<8x128xf32>
    %7 = arith.maximumf %5, %6 : vector<8x128xf32>
    %c0_6 = arith.constant 0 : index
    %c0_7 = arith.constant 0 : index
    %8 = vector.load %arg4[%c0_6, %c0_7] : memref<128x24xf32, #tpu.memory_space<vmem>>, vector<128x24xf32>
    %cst_8 = arith.constant dense<0.000000e+00> : vector<8x24xf32>
    %9 = tpu.matmul %7, %8, %cst_8 {dimension_numbers = #tpu.dot_dimension_numbers<[1], [0], [0], [1], [0, 0, 1, 1], [], []>} : vector<8x128xf32>, vector<128x24xf32>, vector<8x24xf32> -> vector<8x24xf32>
    %c0_9 = arith.constant 0 : index
    %c0_10 = arith.constant 0 : index
    %10 = vector.load %arg5[%c0_9, %c0_10] : memref<1x24xf32, #tpu.memory_space<vmem>>, vector<1x24xf32>
    %11 = vector.broadcast %10 : vector<1x24xf32> to vector<8x24xf32>
    %12 = arith.addf %9, %11 : vector<8x24xf32>
    %cst_11 = arith.constant 0.000000e+00 : f32
    %13 = vector.broadcast %cst_11 : f32 to vector<8x24xf32>
    %14 = arith.maximumf %12, %13 : vector<8x24xf32>
    %c0_12 = arith.constant 0 : index
    %c0_13 = arith.constant 0 : index
    %15 = vector.load %arg6[%c0_12, %c0_13] : memref<8x24xf32, #tpu.memory_space<vmem>>, vector<8x24xf32>
    tpu.vector_store %arg6[%c0_12, %c0_13], %14 {strides = array<i32>} : memref<8x24xf32, #tpu.memory_space<vmem>>, vector<8x24xf32>,
    return
  }
  func.func @transform_0(%arg0: i32) -> (i32, i32) {
    %c0_i32 = arith.constant 0 : i32
    %c0_i32_0 = arith.constant 0 : i32
    return %arg0, %c0_i32 : i32, i32
  }
  func.func @transform_1(%arg0: i32) -> (i32, i32) {
    %c0_i32 = arith.constant 0 : i32
    %c0_i32_0 = arith.constant 0 : i32
    %c0_i32_1 = arith.constant 0 : i32
    return %c0_i32, %c0_i32_0 : i32, i32
  }
  func.func @transform_2(%arg0: i32) -> (i32, i32) {
    %c0_i32 = arith.constant 0 : i32
    %c0_i32_0 = arith.constant 0 : i32
    %c0_i32_1 = arith.constant 0 : i32
    return %c0_i32, %c0_i32_0 : i32, i32
  }
  func.func @transform_3(%arg0: i32) -> (i32, i32) {
    %c0_i32 = arith.constant 0 : i32
    %c0_i32_0 = arith.constant 0 : i32
    %c0_i32_1 = arith.constant 0 : i32
    return %c0_i32, %c0_i32_0 : i32, i32
  }
  func.func @transform_4(%arg0: i32) -> (i32, i32) {
    %c0_i32 = arith.constant 0 : i32
    %c0_i32_0 = arith.constant 0 : i32
    %c0_i32_1 = arith.constant 0 : i32
    return %c0_i32, %c0_i32_0 : i32, i32
  }
  func.func @transform_5(%arg0: i32) -> (i32, i32) {
    %c0_i32 = arith.constant 0 : i32
    %c0_i32_0 = arith.constant 0 : i32
    return %arg0, %c0_i32 : i32, i32
  }
}

</mosaic_0001>

<llo_original>
// kernel: tpu_custom_call.1
$region0: #{tpu_custom_call.1}
  #allocation0 [shape = 'u32[]', space=smem, size = 0x4, offset = 0x4, fixed_abs, tag = 'smem constant byte address 0x4 - core index']
  #allocation1 [shape = 'u32[72,128]{1,0:T(1,128)}', space=vmem, size = 0x9000, scoped, tag = 'internal scratch']
  %s0 = inlined_call_operand.vmem [shape: f32[8,16], index: 0, kind: input, shape index: {}]
  %s1 = inlined_call_operand.vmem [shape: f32[16,128], index: 1, kind: input, shape index: {}]
  %s2 = inlined_call_operand.vmem [shape: f32[1,128], index: 2, kind: input, shape index: {}]
  %s3 = inlined_call_operand.vmem [shape: f32[128,24], index: 3, kind: input, shape index: {}]
  %s4 = inlined_call_operand.vmem [shape: f32[1,24], index: 4, kind: input, shape index: {}]
  %s5 = inlined_call_operand.hbm [shape: f32[8,24], index: 5, kind: output, shape index: {}]
  %s6 = sld [smem:[#allocation0]]
  $region30: #{tpu_custom_call.1} parent=0
    _
  %s8 = ssub.s32 1, %s6
  %s9 = scalar_select 0, %s8, %s6
  $region1: #{tpu_custom_call.1} parent=0
    #allocation2 [shape = 'u8[4096]{0}', space=vmem, size = 0x1000, scoped, tag = 'output window, operand 0, single buffered']
    #allocation3 [shape = 's32[1]{0}', space=sflag, size = 0x4, scoped, tag = 'scoped memory for tpu_custom_call.1']
    %10 = vsyncpa [#allocation3], 0
    // Predicated region
    $region2: #{tpu_custom_call.1} parent=1 // pred_check
      _
    $region3: #{tpu_custom_call.1} parent=1 // pred_check_branch
      %12 = sbr.rel (0) target = $region5
    $region4: #{tpu_custom_call.1} parent=1 // pred_region
      _
    $region5: #{tpu_custom_call.1} parent=1 // pred_fallthru
      _
    // Predicated region
    $region6: #{tpu_custom_call.1} parent=1 // pred_check
      _
    $region7: #{tpu_custom_call.1} parent=1 // pred_check_branch
      %14 = sbr.rel (0) target = $region9
    $region8: #{tpu_custom_call.1} parent=1 // pred_region
      _
    $region9: #{tpu_custom_call.1} parent=1 // pred_fallthru
      _
    // Predicated region
    $region10: #{tpu_custom_call.1} parent=1 // pred_check
      _
    $region11: #{tpu_custom_call.1} parent=1 // pred_check_branch
      %16 = sbr.rel (0) target = $region13
    $region12: #{tpu_custom_call.1} parent=1 // pred_region
      _
    $region13: #{tpu_custom_call.1} parent=1 // pred_fallthru
      _
    // Predicated region
    $region14: #{tpu_custom_call.1} parent=1 // pred_check
      _
    $region15: #{tpu_custom_call.1} parent=1 // pred_check_branch
      %18 = sbr.rel (0) target = $region17
    $region16: #{tpu_custom_call.1} parent=1 // pred_region
      _
    $region17: #{tpu_custom_call.1} parent=1 // pred_fallthru
      _
    // Predicated region
    $region18: #{tpu_custom_call.1} parent=1 // pred_check
      _
    $region19: #{tpu_custom_call.1} parent=1 // pred_check_branch
      %20 = sbr.rel (0) target = $region21
    $region20: #{tpu_custom_call.1} parent=1 // pred_region
      _
    $region21: #{tpu_custom_call.1} parent=1 // pred_fallthru
      _
    %v21 = vld [vmem:[%s0] sm:$0xff]
    %v22 = vld [vmem:[%s1] sm:$0xff]
    %v23 = vld [vmem:[%s1 + $0x8] sm:$0xff]
    %v24 = vld [vmem:[%s2] sm:$0x1]
    %v26 = vperm.slane %v24, 0
    %vm28 = vcmask 130048
    %v30 = vsel %vm28, %v21, 0
    %32 = vmatpush.msra.mxu0 0.0
    %33 = vmatpush.msra.mxu0 0.0
    %34 = vmatpush.msra.mxu0 0.0
    %35 = vmatpush.msra.mxu0 0.0
    %36 = vmatpush.msra.mxu0 0.0
    %37 = vmatpush.msra.mxu0 0.0
    %38 = vmatpush.msra.mxu0 0.0
    %39 = vmatpush.msra.mxu0 0.0
    %40 = vmatpush.msra.mxu0 0.0
    %41 = vmatpush.msra.mxu0 0.0
    %42 = vmatpush.msra.mxu0 0.0
    %43 = vmatpush.msra.mxu0 0.0
    %44 = vmatpush.msra.mxu0 0.0
    %45 = vmatpush.msra.mxu0 0.0
    %46 = vmatpush.msra.mxu0 %v23
    %47 = vmatpush.msra.mxu0 %v22
    %48 = vmatmul.f32.gmra.mxu0 %v30
    %v49 = vpop.f32.mrf.mxu0
    %v50 = vadd.f32 %v26, %v49
    %51 = vdwg.mxu0
    %v52 = vmax.f32 %v50, 0.0
    %v53 = vld [vmem:[%s3] sm:$0xff]
    %v54 = vld [vmem:[%s3 + $0x8] sm:$0xff]
    %v55 = vld [vmem:[%s3 + $0x10] sm:$0xff]
    %v56 = vld [vmem:[%s3 + $0x18] sm:$0xff]
    %v57 = vld [vmem:[%s3 + $0x20] sm:$0xff]
    %v58 = vld [vmem:[%s3 + $0x28] sm:$0xff]
    %v59 = vld [vmem:[%s3 + $0x30] sm:$0xff]
    %v60 = vld [vmem:[%s3 + $0x38] sm:$0xff]
    %v61 = vld [vmem:[%s3 + $0x40] sm:$0xff]
    %v62 = vld [vmem:[%s3 + $0x48] sm:$0xff]
    %v63 = vld [vmem:[%s3 + $0x50] sm:$0xff]
    %v64 = vld [vmem:[%s3 + $0x58] sm:$0xff]
    %v65 = vld [vmem:[%s3 + $0x60] sm:$0xff]
    %v66 = vld [vmem:[%s3 + $0x68] sm:$0xff]
    %v67 = vld [vmem:[%s3 + $0x70] sm:$0xff]
    %v68 = vld [vmem:[%s3 + $0x78] sm:$0xff]
    %v69 = vld [vmem:[%s4] sm:$0x1]
    %v71 = vperm.slane %v69, 0
    %73 = vmatpush.msra.mxu0 %v68
    %74 = vmatpush.msra.mxu0 %v67
    %75 = vmatpush.msra.mxu0 %v66
    %76 = vmatpush.msra.mxu0 %v65
    %77 = vmatpush.msra.mxu0 %v64
    %78 = vmatpush.msra.mxu0 %v63
    %79 = vmatpush.msra.mxu0 %v62
    %80 = vmatpush.msra.mxu0 %v61
    %81 = vmatpush.msra.mxu0 %v60
    %82 = vmatpush.msra.mxu0 %v59
    %83 = vmatpush.msra.mxu0 %v58
    %84 = vmatpush.msra.mxu0 %v57
    %85 = vmatpush.msra.mxu0 %v56
    %86 = vmatpush.msra.mxu0 %v55
    %87 = vmatpush.msra.mxu0 %v54
    %88 = vmatpush.msra.mxu0 %v53
    %89 = vmatmul.f32.gmra.mxu0 %v52
    %v90 = vpop.f32.mrf.mxu0
    %v91 = vadd.f32 %v71, %v90
    %92 = vdwg.mxu0
    %v93 = vmax.f32 %v91, 0.0
    %vm94 = vcmask 195584
    %95 = vst.msk [vmem:[#allocation2] sm:$0xff] %vm94, %v93
    // Predicated region
    $region22: #{tpu_custom_call.1} parent=1 // pred_check
      _
    $region23: #{tpu_custom_call.1} parent=1 // pred_check_branch
      %97 = sbr.rel (0) target = $region25
    $region24: #{tpu_custom_call.1} parent=1 // pred_region
      %99 = vsyncadd [#allocation3], 0
      %s101 = sshll.u32 [#allocation2], 4
      %s102 = int_to_ptr.vmem [resolvable:$true] %s101
      %s103 = sshll.u32 %s5, 4
      %s104 = int_to_ptr.hbm [resolvable:$true] %s103
      %106 = dma.vmem_to_hbm [thread:$0]  %s102, 128, %s104, [#allocation3]
    $region25: #{tpu_custom_call.1} parent=1 // pred_fallthru
      _
    // Predicated region
    $region26: #{tpu_custom_call.1} parent=1 // pred_check
      _
    $region27: #{tpu_custom_call.1} parent=1 // pred_check_branch
      %108 = sbr.rel (0) target = $region29
    $region28: #{tpu_custom_call.1} parent=1 // pred_region
      %110 = dma.done [#allocation3], 128
    $region29: #{tpu_custom_call.1} parent=1 // pred_fallthru
      _
    %111 = vsyncpa [#allocation3], 1

</llo_original>
